<compile_context>
chip_gen: v5e
topology: v5e:2x2
jax: 0.10.0
libtpu: 0.0.40
codegen_flags: <defaults>
</compile_context>

<pallas_src>
import re

import jax
import jax.numpy as jnp
from jax.experimental import pallas as pl
from jax.experimental.pallas import tpu as pltpu

_LANE = 128  # vreg lane width


def _cls_head_kernel(x_ref, w1_ref, b1_ref, w2_ref, b2_ref, o_ref):
    # x:  [tm, H]    w1: [H, H]      b1: [1, H]
    # w2: [H, Lp]    b2: [1, Lp]     out: [tm, Lp]   (Lp = num_labels padded to 128)
    x = x_ref[...].astype(w1_ref.dtype)
    h = jnp.dot(x, w1_ref[...], preferred_element_type=jnp.float32)
    h = h + b1_ref[...].astype(jnp.float32)
    h = jnp.tanh(h)                                   # EUP, f32
    out = jnp.dot(h.astype(w2_ref.dtype), w2_ref[...],
                  preferred_element_type=jnp.float32)
    out = out + b2_ref[...].astype(jnp.float32)
    o_ref[...] = out.astype(o_ref.dtype)


def _resident_spec(shape):
    """BlockSpec for an operand loaded once (constant index_map).

    Requests a single pipeline buffer (the second buffer is pure waste for a
    constant index_map). Falls back to the default if pipeline_mode/Buffered
    is unavailable in the installed jax.
    """
    index_map = lambda i: (0,) * len(shape)
    buffered = getattr(pl, "Buffered", None)
    if buffered is not None:
        try:
            return pl.BlockSpec(shape, index_map, pipeline_mode=buffered(1)), True
        except TypeError:
            pass
    return pl.BlockSpec(shape, index_map), False


def _round_up(x, m):
    return ((x + m - 1) // m) * m


def _tpu_defaults(weight_bytes):
    """Generation-specific tiling defaults (block_m, vmem cap, TC-split hint)."""
    kind = ""
    try:
        kind = jax.devices()[0].device_kind.lower()
    except Exception:
        pass
    gen = None
    if "tpu" in kind:
        m = re.search(r"(\d+)", kind)
        if m:
            gen = int(m.group(1))
    if gen is not None and gen >= 7:
        # v7x: 64 MiB VMEM/TC but 2 TCs -> modest tiles, always >=2 M-tiles.
        return dict(block_m=512 if weight_bytes <= 2 else 256,
                    vmem_cap=56 << 20, split_across_cores=True)
    if gen in (5, 6):
        # 128 MiB VMEM, single TC -> big tiles, fewer grid steps.
        return dict(block_m=512, vmem_cap=96 << 20, split_across_cores=False)
    # Unknown / conservative.
    return dict(block_m=256, vmem_cap=48 << 20, split_across_cores=False)


def wav2vec2_classification_head(features, w_dense, b_dense, w_out, b_out,
                                 *, block_m=None, weight_dtype=jnp.bfloat16,
                                 min_pallas_rows=16):
    """Forward pass of Wav2Vec2ClassificationHead (inference).

    features: [..., H]; w_dense: [H, H]; b_dense: [H]; w_out: [H, L]; b_out: [L].
    Weights are stored as [in, out] (transposed vs. torch.nn.Linear.weight).
    Output keeps the dtype of `features`; MXU accumulation is always f32.
    """
    lead_shape = features.shape[:-1]
    H = features.shape[-1]
    L = w_out.shape[1]
    out_dtype = features.dtype

    feats2d = features.reshape(-1, H)
    B = feats2d.shape[0]

    # Tiny batches: one grid step dominated by weight DMA + launch overhead;
    # XLA's fused dot is at least as fast. (min_pallas_rows=0 forces Pallas.)
    if B <= min_pallas_rows:
        xf = feats2d.astype(jnp.float32)
        h = jnp.tanh(xf @ w_dense.astype(jnp.float32) + b_dense.astype(jnp.float32))
        out = h @ w_out.astype(jnp.float32) + b_out.astype(jnp.float32)
        return out.astype(out_dtype).reshape(lead_shape + (L,))

    # Low-precision storage for weights + streamed activations (f32 accumulate
    # in-kernel; output dtype unchanged). NOTE: fp8 is NOT a drop-in here.
    if weight_dtype is not None:
        feats2d = feats2d.astype(weight_dtype)
        w_dense = w_dense.astype(weight_dtype)
        b_dense = b_dense.astype(weight_dtype)
        w_out = w_out.astype(weight_dtype)
        b_out = b_out.astype(weight_dtype)

    # Lane-dense output: pad num_labels up to 128 lanes (never beyond what's
    # needed -- the second GEMM is a tiny fraction of the FLOPs).
    L_pad = max(_LANE, _round_up(L, _LANE))
    if L_pad != L:
        w_out = jnp.pad(w_out, ((0, 0), (0, L_pad - L)))
        b_out = jnp.pad(b_out, ((0, L_pad - L),))

    b_dense2d = b_dense.reshape(1, H)
    b_out2d = b_out.reshape(1, L_pad)

    w_bytes = jnp.dtype(w_dense.dtype).itemsize
    act_bytes = jnp.dtype(feats2d.dtype).itemsize
    out_bytes = jnp.dtype(out_dtype).itemsize

    defaults = _tpu_defaults(w_bytes)
    if block_m is None:
        block_m = defaults["block_m"]
    vmem_cap = defaults["vmem_cap"]

    # M-tiling: stream the batch. On v7x guarantee >=2 M-tiles so the
    # "parallel" axis can shard across both TensorCores.
    if B <= block_m:
        if defaults["split_across_cores"] and B >= 16:
            tm = min(block_m, _round_up(pl.cdiv(B, 2), 8))
        else:
            tm = B                      # full-extent block: exempt from 8-divisibility
    else:
        tm = block_m                    # multiple of 8 sublanes
    grid_m = pl.cdiv(B, tm)

    # Resident-operand specs (single pipeline buffer when supported).
    w1_spec, single_buf = _resident_spec((H, H))
    b1_spec, _ = _resident_spec((1, H))
    w2_spec, _ = _resident_spec((H, L_pad))
    b2_spec, _ = _resident_spec((1, L_pad))
    weight_bufs = 1 if single_buf else 2

    # VMEM budget matching actual buffer counts (+25% margin for compiler temps).
    est = (2 * tm * H * act_bytes                       # x tiles (double-buffered)
           + 2 * tm * L_pad * out_bytes                 # out tiles (double-buffered)
           + weight_bufs * (H * H + H * L_pad + 8 * H + 8 * L_pad) * w_bytes)
    vmem_bytes = int(min(max(est * 5 // 4 + (1 << 20), 16 << 20), vmem_cap))

    cost = pl.CostEstimate(
        flops=2 * B * H * (H + L_pad),
        transcendentals=B * H,
        bytes_accessed=(B * H * act_bytes
                        + (H * H + H * L_pad + H + L_pad) * w_bytes
                        + B * L_pad * out_bytes),
    )

    out_padded = pl.pallas_call(
        _cls_head_kernel,
        out_shape=jax.ShapeDtypeStruct((B, L_pad), out_dtype),
        grid=(grid_m,),
        in_specs=[
            pl.BlockSpec((tm, H), lambda i: (i, 0)),    # x: streamed over M
            w1_spec,                                    # w1: resident, single-buffered
            b1_spec,                                    # b1: resident
            w2_spec,                                    # w2: resident
            b2_spec,                                    # b2: resident
        ],
        out_specs=pl.BlockSpec((tm, L_pad), lambda i: (i, 0)),
        compiler_params=pltpu.CompilerParams(
            dimension_semantics=("parallel",),
            vmem_limit_bytes=vmem_bytes,
        ),
        cost_estimate=cost,
    )(feats2d, w_dense, b_dense2d, w_out, b_out2d)

    return out_padded[:, :L].reshape(lead_shape + (L,))


if __name__ == "__main__":
    # Small config consistent with the module: hidden_size=32, num_labels=8, batch=4.
    batch, hidden, num_labels = 4, 32, 8

    key = jax.random.PRNGKey(0)
    k_x, k_w1, k_b1, k_w2, k_b2 = jax.random.split(key, 5)

    x = jax.random.normal(k_x, (batch, hidden), dtype=jnp.float32)
    # Deterministic parameter init (weights stored as [in, out]).
    w_dense = jax.random.normal(k_w1, (hidden, hidden), dtype=jnp.float32) * 0.02
    b_dense = jax.random.normal(k_b1, (hidden,), dtype=jnp.float32) * 0.02
    w_out = jax.random.normal(k_w2, (hidden, num_labels), dtype=jnp.float32) * 0.02
    b_out = jax.random.normal(k_b2, (num_labels,), dtype=jnp.float32) * 0.02

    ref = jnp.tanh(x @ w_dense + b_dense) @ w_out + b_out

    # 1) f32 path, Pallas forced even for tiny batch (min_pallas_rows=0).
    out_f32 = jax.block_until_ready(
        wav2vec2_classification_head(x, w_dense, b_dense, w_out, b_out,
                                     weight_dtype=None, min_pallas_rows=0))
    assert out_f32.shape == (batch, num_labels)
    assert out_f32.dtype == jnp.float32
    assert jnp.allclose(out_f32, ref, atol=1e-5, rtol=1e-5)

    # 2) bf16-weight path (production default), Pallas forced; output stays f32.
    out_bf16 = jax.block_until_ready(
        wav2vec2_classification_head(x, w_dense, b_dense, w_out, b_out,
                                     min_pallas_rows=0))
    assert out_bf16.shape == (batch, num_labels)
    assert out_bf16.dtype == jnp.float32
    assert jnp.allclose(out_bf16, ref, atol=2e-2, rtol=1e-1)

    # 3) Tiled (grid > 1 capable) path at a modest shape, bf16 default.
    B2, H2, L2 = 512, 128, 8
    kk = jax.random.split(jax.random.PRNGKey(1), 5)
    x2 = jax.random.normal(kk[0], (B2, H2), dtype=jnp.float32)
    w1_2 = jax.random.normal(kk[1], (H2, H2), dtype=jnp.float32) * 0.02
    b1_2 = jax.random.normal(kk[2], (H2,), dtype=jnp.float32) * 0.02
    w2_2 = jax.random.normal(kk[3], (H2, L2), dtype=jnp.float32) * 0.02
    b2_2 = jax.random.normal(kk[4], (L2,), dtype=jnp.float32) * 0.02
    ref2 = jnp.tanh(x2 @ w1_2 + b1_2) @ w2_2 + b2_2

    out2 = jax.block_until_ready(
        wav2vec2_classification_head(x2, w1_2, b1_2, w2_2, b2_2, block_m=256))
    assert out2.shape == (B2, L2)
    assert jnp.allclose(out2, ref2, atol=2e-2, rtol=1e-1)

    # 3b) Same tiled shape, f32 weights, tight tolerance.
    out2_f32 = jax.block_until_ready(
        wav2vec2_classification_head(x2, w1_2, b1_2, w2_2, b2_2,
                                     block_m=256, weight_dtype=None))
    assert jnp.allclose(out2_f32, ref2, atol=1e-4, rtol=1e-4)

    # 4) Tiny-batch jnp fallback path (default min_pallas_rows=16).
    out_fb = jax.block_until_ready(
        wav2vec2_classification_head(x, w_dense, b_dense, w_out, b_out))
    assert jnp.allclose(out_fb, ref, atol=1e-5, rtol=1e-5)

    print("KERNEL_OK")
</pallas_src>

<mosaic_0001>
module attributes {stable_mosaic.version = 11 : i64} {
  func.func @_cls_head_kernel(%arg0: i32, %arg1: memref<4x32xf32, #tpu.memory_space<vmem>>, %arg2: memref<32x32xf32, #tpu.memory_space<vmem>>, %arg3: memref<1x32xf32, #tpu.memory_space<vmem>>, %arg4: memref<32x128xf32, #tpu.memory_space<vmem>>, %arg5: memref<1x128xf32, #tpu.memory_space<vmem>>, %arg6: memref<4x128xf32, #tpu.memory_space<vmem>>) attributes {dimension_semantics = [#tpu.dimension_semantics<parallel>], iteration_bounds = array<i64: 1>, scalar_prefetch = 0 : i64, scratch_operands = 0 : i64, tpu.core_type = #tpu.core_type<tc>, window_params = [{transform_indices = @transform_0, window_bounds = array<i64: 4, 32>}, {pipeline_mode = #tpu.pipeline_mode<synchronous>, transform_indices = @transform_1, window_bounds = array<i64: 32, 32>}, {pipeline_mode = #tpu.pipeline_mode<synchronous>, transform_indices = @transform_2, window_bounds = array<i64: 1, 32>}, {pipeline_mode = #tpu.pipeline_mode<synchronous>, transform_indices = @transform_3, window_bounds = array<i64: 32, 128>}, {pipeline_mode = #tpu.pipeline_mode<synchronous>, transform_indices = @transform_4, window_bounds = array<i64: 1, 128>}, {transform_indices = @transform_5, window_bounds = array<i64: 4, 128>}]} {
    %c0 = arith.constant 0 : index
    %c0_0 = arith.constant 0 : index
    %0 = vector.load %arg1[%c0, %c0_0] : memref<4x32xf32, #tpu.memory_space<vmem>>, vector<4x32xf32>
    %c0_1 = arith.constant 0 : index
    %c0_2 = arith.constant 0 : index
    %1 = vector.load %arg2[%c0_1, %c0_2] : memref<32x32xf32, #tpu.memory_space<vmem>>, vector<32x32xf32>
    %cst = arith.constant dense<0.000000e+00> : vector<4x32xf32>
    %2 = tpu.matmul %0, %1, %cst {dimension_numbers = #tpu.dot_dimension_numbers<[1], [0], [0], [1], [0, 0, 1, 1], [], []>} : vector<4x32xf32>, vector<32x32xf32>, vector<4x32xf32> -> vector<4x32xf32>
    %c0_3 = arith.constant 0 : index
    %c0_4 = arith.constant 0 : index
    %3 = vector.load %arg3[%c0_3, %c0_4] : memref<1x32xf32, #tpu.memory_space<vmem>>, vector<1x32xf32>
    %4 = vector.broadcast %3 : vector<1x32xf32> to vector<4x32xf32>
    %5 = arith.addf %2, %4 : vector<4x32xf32>
    %6 = math.tanh %5 : vector<4x32xf32>
    %c0_5 = arith.constant 0 : index
    %c0_6 = arith.constant 0 : index
    %7 = vector.load %arg4[%c0_5, %c0_6] : memref<32x128xf32, #tpu.memory_space<vmem>>, vector<32x128xf32>
    %cst_7 = arith.constant dense<0.000000e+00> : vector<4x128xf32>
    %8 = tpu.matmul %6, %7, %cst_7 {dimension_numbers = #tpu.dot_dimension_numbers<[1], [0], [0], [1], [0, 0, 1, 1], [], []>} : vector<4x32xf32>, vector<32x128xf32>, vector<4x128xf32> -> vector<4x128xf32>
    %c0_8 = arith.constant 0 : index
    %c0_9 = arith.constant 0 : index
    %9 = vector.load %arg5[%c0_8, %c0_9] : memref<1x128xf32, #tpu.memory_space<vmem>>, vector<1x128xf32>
    %10 = vector.broadcast %9 : vector<1x128xf32> to vector<4x128xf32>
    %11 = arith.addf %8, %10 : vector<4x128xf32>
    %c0_10 = arith.constant 0 : index
    %c0_11 = arith.constant 0 : index
    %12 = vector.load %arg6[%c0_10, %c0_11] : memref<4x128xf32, #tpu.memory_space<vmem>>, vector<4x128xf32>
    tpu.vector_store %arg6[%c0_10, %c0_11], %11 {strides = array<i32>} : memref<4x128xf32, #tpu.memory_space<vmem>>, vector<4x128xf32>,
    return
  }
  func.func @transform_0(%arg0: i32) -> (i32, i32) {
    %c0_i32 = arith.constant 0 : i32
    %c0_i32_0 = arith.constant 0 : i32
    return %arg0, %c0_i32 : i32, i32
  }
  func.func @transform_1(%arg0: i32) -> (i32, i32) {
    %c0_i32 = arith.constant 0 : i32
    %c0_i32_0 = arith.constant 0 : i32
    %c0_i32_1 = arith.constant 0 : i32
    return %c0_i32, %c0_i32_0 : i32, i32
  }
  func.func @transform_2(%arg0: i32) -> (i32, i32) {
    %c0_i32 = arith.constant 0 : i32
    %c0_i32_0 = arith.constant 0 : i32
    %c0_i32_1 = arith.constant 0 : i32
    return %c0_i32, %c0_i32_0 : i32, i32
  }
  func.func @transform_3(%arg0: i32) -> (i32, i32) {
    %c0_i32 = arith.constant 0 : i32
    %c0_i32_0 = arith.constant 0 : i32
    %c0_i32_1 = arith.constant 0 : i32
    return %c0_i32, %c0_i32_0 : i32, i32
  }
  func.func @transform_4(%arg0: i32) -> (i32, i32) {
    %c0_i32 = arith.constant 0 : i32
    %c0_i32_0 = arith.constant 0 : i32
    %c0_i32_1 = arith.constant 0 : i32
    return %c0_i32, %c0_i32_0 : i32, i32
  }
  func.func @transform_5(%arg0: i32) -> (i32, i32) {
    %c0_i32 = arith.constant 0 : i32
    %c0_i32_0 = arith.constant 0 : i32
    return %arg0, %c0_i32 : i32, i32
  }
}

</mosaic_0001>

<llo_original>
// kernel: tpu_custom_call.1
$region0: #{tpu_custom_call.1}
  #allocation0 [shape = 'u32[]', space=smem, size = 0x4, offset = 0x4, fixed_abs, tag = 'smem constant byte address 0x4 - core index']
  #allocation1 [shape = 'u32[72,128]{1,0:T(1,128)}', space=vmem, size = 0x9000, scoped, tag = 'internal scratch']
  %s0 = inlined_call_operand.hbm [shape: f32[4,32], index: 0, kind: input, shape index: {}]
  %s1 = inlined_call_operand.hbm [shape: f32[32,32], index: 1, kind: input, shape index: {}]
  %s2 = inlined_call_operand.vmem [shape: f32[1,32], index: 2, kind: input, shape index: {}]
  %s3 = inlined_call_operand.hbm [shape: f32[32,128], index: 3, kind: input, shape index: {}]
  %s4 = inlined_call_operand.vmem [shape: f32[1,128], index: 4, kind: input, shape index: {}]
  %s5 = inlined_call_operand.hbm [shape: f32[4,128], index: 5, kind: output, shape index: {}]
  %s6 = sld [smem:[#allocation0]]
  $region42: #{tpu_custom_call.1} parent=0
    _
  %s8 = ssub.s32 1, %s6
  %s9 = scalar_select 0, %s8, %s6
  $region1: #{tpu_custom_call.1} parent=0
    #allocation2 [shape = 'u8[2048]{0}', space=vmem, size = 0x800, scoped, tag = 'input window, operand 0, single buffered']
    #allocation3 [shape = 's32[1]{0}', space=sflag, size = 0x4, scoped, tag = 'scoped memory for tpu_custom_call.1']
    #allocation4 [shape = 's32[1]{0}', space=sflag, size = 0x4, scoped, tag = 'scoped memory for tpu_custom_call.1']
    #allocation5 [shape = 'u8[16384]{0}', space=vmem, size = 0x4000, scoped, tag = 'input window, operand 1, single buffered']
    #allocation6 [shape = 's32[1]{0}', space=sflag, size = 0x4, scoped, tag = 'scoped memory for tpu_custom_call.1']
    #allocation7 [shape = 'u8[16384]{0}', space=vmem, size = 0x4000, scoped, tag = 'input window, operand 3, single buffered']
    #allocation8 [shape = 'u8[2048]{0}', space=vmem, size = 0x800, scoped, tag = 'output window, operand 0, single buffered']
    %10 = vsyncpa [#allocation3], 0
    %11 = vsyncpa [#allocation6], 0
    %12 = vsyncpa [#allocation4], 0
    // Predicated region
    $region2: #{tpu_custom_call.1} parent=1 // pred_check
      _
    $region3: #{tpu_custom_call.1} parent=1 // pred_check_branch
      %14 = sbr.rel (0) target = $region5
    $region4: #{tpu_custom_call.1} parent=1 // pred_region
      %16 = vsyncadd [#allocation3], 0
      %s18 = sshll.u32 %s0, 4
      %s19 = int_to_ptr.hbm [resolvable:$true] %s18
      %s20 = sshll.u32 [#allocation2], 4
      %s21 = int_to_ptr.vmem [resolvable:$true] %s20
      %23 = dma.hbm_to_vmem [thread:$0]  %s19, 64, %s21, [#allocation3]
    $region5: #{tpu_custom_call.1} parent=1 // pred_fallthru
      _
    // Predicated region
    $region6: #{tpu_custom_call.1} parent=1 // pred_check
      _
    $region7: #{tpu_custom_call.1} parent=1 // pred_check_branch
      %25 = sbr.rel (0) target = $region9
    $region8: #{tpu_custom_call.1} parent=1 // pred_region
      %27 = vsyncadd [#allocation6], 0
      %s28 = sshll.u32 %s1, 4
      %s29 = int_to_ptr.hbm [resolvable:$true] %s28
      %s30 = sshll.u32 [#allocation5], 4
      %s31 = int_to_ptr.vmem [resolvable:$true] %s30
      %36 = dma.hbm_to_vmem [thread:$0]  %s29, 512, %s31, [#allocation6], 128, 128, 8
    $region9: #{tpu_custom_call.1} parent=1 // pred_fallthru
      _
    // Predicated region
    $region10: #{tpu_custom_call.1} parent=1 // pred_check
      _
    $region11: #{tpu_custom_call.1} parent=1 // pred_check_branch
      %38 = sbr.rel (0) target = $region13
    $region12: #{tpu_custom_call.1} parent=1 // pred_region
      _
    $region13: #{tpu_custom_call.1} parent=1 // pred_fallthru
      _
    // Predicated region
    $region14: #{tpu_custom_call.1} parent=1 // pred_check
      _
    $region15: #{tpu_custom_call.1} parent=1 // pred_check_branch
      %40 = sbr.rel (0) target = $region17
    $region16: #{tpu_custom_call.1} parent=1 // pred_region
      %42 = vsyncadd [#allocation6], 0
      %s43 = sshll.u32 %s3, 4
      %s44 = int_to_ptr.hbm [resolvable:$true] %s43
      %s45 = sshll.u32 [#allocation7], 4
      %s46 = int_to_ptr.vmem [resolvable:$true] %s45
      %51 = dma.hbm_to_vmem [thread:$0]  %s44, 512, %s46, [#allocation6], 128, 128, 8
    $region17: #{tpu_custom_call.1} parent=1 // pred_fallthru
      _
    // Predicated region
    $region18: #{tpu_custom_call.1} parent=1 // pred_check
      _
    $region19: #{tpu_custom_call.1} parent=1 // pred_check_branch
      %53 = sbr.rel (0) target = $region21
    $region20: #{tpu_custom_call.1} parent=1 // pred_region
      _
    $region21: #{tpu_custom_call.1} parent=1 // pred_fallthru
      _
    // Predicated region
    $region22: #{tpu_custom_call.1} parent=1 // pred_check
      _
    $region23: #{tpu_custom_call.1} parent=1 // pred_check_branch
      %55 = sbr.rel (0) target = $region25
    $region24: #{tpu_custom_call.1} parent=1 // pred_region
      %57 = dma.done [#allocation3], 64
    $region25: #{tpu_custom_call.1} parent=1 // pred_fallthru
      _
    // Predicated region
    $region26: #{tpu_custom_call.1} parent=1 // pred_check
      _
    $region27: #{tpu_custom_call.1} parent=1 // pred_check_branch
      %59 = sbr.rel (0) target = $region29
    $region28: #{tpu_custom_call.1} parent=1 // pred_region
      %61 = dma.done [#allocation6], 512
    $region29: #{tpu_custom_call.1} parent=1 // pred_fallthru
      _
    // Predicated region
    $region30: #{tpu_custom_call.1} parent=1 // pred_check
      _
    $region31: #{tpu_custom_call.1} parent=1 // pred_check_branch
      %63 = sbr.rel (0) target = $region33
    $region32: #{tpu_custom_call.1} parent=1 // pred_region
      %65 = dma.done [#allocation6], 512
    $region33: #{tpu_custom_call.1} parent=1 // pred_fallthru
      _
    %v66 = vld [vmem:[#allocation2] sm:$0xf]
    %v67 = vld [vmem:[#allocation5] sm:$0xff]
    %v68 = vld [vmem:[#allocation5 + $0x8] sm:$0xff]
    %v69 = vld [vmem:[#allocation5 + $0x10] sm:$0xff]
    %v70 = vld [vmem:[#allocation5 + $0x18] sm:$0xff]
    %v71 = vld [vmem:[%s2] sm:$0x1]
    %v73 = vperm.slane %v71, 0
    %vm75 = vcmask 261120
    %v77 = vsel %vm75, %v66, 0
    %79 = vmatpush.msra.mxu0 0.0
    %80 = vmatpush.msra.mxu0 0.0
    %81 = vmatpush.msra.mxu0 0.0
    %82 = vmatpush.msra.mxu0 0.0
    %83 = vmatpush.msra.mxu0 0.0
    %84 = vmatpush.msra.mxu0 0.0
    %85 = vmatpush.msra.mxu0 0.0
    %86 = vmatpush.msra.mxu0 0.0
    %87 = vmatpush.msra.mxu0 0.0
    %88 = vmatpush.msra.mxu0 0.0
    %89 = vmatpush.msra.mxu0 0.0
    %90 = vmatpush.msra.mxu0 0.0
    %91 = vmatpush.msra.mxu0 %v70
    %92 = vmatpush.msra.mxu0 %v69
    %93 = vmatpush.msra.mxu0 %v68
    %94 = vmatpush.msra.mxu0 %v67
    %95 = vmatmul.f32.gmra.mxu0 %v77
    %v96 = vpop.f32.mrf.mxu0
    %v97 = vadd.f32 %v73, %v96
    %98 = vdwg.mxu0
    %v99 = vtanh.pop %v97
    %v100 = vld [vmem:[#allocation7] sm:$0xff]
    %v101 = vld [vmem:[#allocation7 + $0x8] sm:$0xff]
    %v102 = vld [vmem:[#allocation7 + $0x10] sm:$0xff]
    %v103 = vld [vmem:[#allocation7 + $0x18] sm:$0xff]
    %v104 = vld [vmem:[%s4] sm:$0x1]
    %v106 = vperm.slane %v104, 0
    %v109 = vsel %vm75, %v99, 0
    %111 = vmatpush.msra.mxu0 0.0
    %112 = vmatpush.msra.mxu0 0.0
    %113 = vmatpush.msra.mxu0 0.0
    %114 = vmatpush.msra.mxu0 0.0
    %115 = vmatpush.msra.mxu0 0.0
    %116 = vmatpush.msra.mxu0 0.0
    %117 = vmatpush.msra.mxu0 0.0
    %118 = vmatpush.msra.mxu0 0.0
    %119 = vmatpush.msra.mxu0 0.0
    %120 = vmatpush.msra.mxu0 0.0
    %121 = vmatpush.msra.mxu0 0.0
    %122 = vmatpush.msra.mxu0 0.0
    %123 = vmatpush.msra.mxu0 %v103
    %124 = vmatpush.msra.mxu0 %v102
    %125 = vmatpush.msra.mxu0 %v101
    %126 = vmatpush.msra.mxu0 %v100
    %127 = vmatmul.f32.gmra.mxu0 %v109
    %v128 = vpop.f32.mrf.mxu0
    %v129 = vadd.f32 %v106, %v128
    %130 = vdwg.mxu0
    %131 = vst [vmem:[#allocation8] sm:$0xf] %v129
    // Predicated region
    $region34: #{tpu_custom_call.1} parent=1 // pred_check
      _
    $region35: #{tpu_custom_call.1} parent=1 // pred_check_branch
      %133 = sbr.rel (0) target = $region37
    $region36: #{tpu_custom_call.1} parent=1 // pred_region
      %135 = vsyncadd [#allocation4], 0
      %s137 = sshll.u32 [#allocation8], 4
      %s138 = int_to_ptr.vmem [resolvable:$true] %s137
      %s139 = sshll.u32 %s5, 4
      %s140 = int_to_ptr.hbm [resolvable:$true] %s139
      %142 = dma.vmem_to_hbm [thread:$0]  %s138, 64, %s140, [#allocation4]
    $region37: #{tpu_custom_call.1} parent=1 // pred_fallthru
      _
    // Predicated region
    $region38: #{tpu_custom_call.1} parent=1 // pred_check
      _
    $region39: #{tpu_custom_call.1} parent=1 // pred_check_branch
      %144 = sbr.rel (0) target = $region41
    $region40: #{tpu_custom_call.1} parent=1 // pred_region
      %146 = dma.done [#allocation4], 64
    $region41: #{tpu_custom_call.1} parent=1 // pred_fallthru
      _
    %147 = vsyncpa [#allocation3], 1
    %148 = vsyncpa [#allocation6], 1
    %149 = vsyncpa [#allocation4], 1

</llo_original>
